<compile_context>
chip_gen: v7x
topology: tpu7x:2x2x1
jax: 0.10.0
libtpu: 0.0.40
codegen_flags: <defaults>
</compile_context>

<pallas_src>
import functools

import jax
import jax.numpy as jnp
from jax.experimental import pallas as pl
from jax.experimental.pallas import tpu as pltpu


def _mlp_kernel(x_ref, w1_ref, b1_ref, w2_ref, b2_ref, w3_ref, b3_ref, o_ref):
    # Layer 1: (bb, D) @ (D, 128) on the MXU; bias + ReLU on the VPU.
    h1 = jnp.dot(x_ref[...], w1_ref[...], preferred_element_type=jnp.float32)
    h1 = jnp.maximum(h1 + b1_ref[...], 0.0)

    # Layer 2: (bb, 128) @ (128, 64)
    h2 = jnp.dot(h1, w2_ref[...], preferred_element_type=jnp.float32)
    h2 = jnp.maximum(h2 + b2_ref[...], 0.0)

    # Layer 3: (bb, 64) @ (64, 5) stored directly in (B, 5) layout.
    o = jnp.dot(h2, w3_ref[...], preferred_element_type=jnp.float32)
    o_ref[...] = (o + b3_ref[...]).astype(o_ref.dtype)


def _round_up(v, m):
    return -(-v // m) * m


def _pick_block_b(batch, d, requested):
    """Batch-tile heuristic.

    Small batches: single full-batch tile (grid overhead dominates anyway).
    Larger batches: >= 2 grid steps (lets the "parallel" axis shard across
    v7x's two TensorCores), lane/sublane-aligned, capped by a conservative
    VMEM budget that accounts for the double-buffered x tile, f32 h1/h2
    intermediates and the double-buffered output tile.
    """
    if requested is not None:
        bb = min(int(requested), batch)
        if bb < batch:
            bb = max(8, (bb // 8) * 8)   # partial tiles must be sublane-aligned
        return bb
    if batch <= 256:
        return batch
    # Bytes of VMEM per batch row held live inside the pipeline (all f32):
    #   x (double-buffered) + h1(128) + h2(64) + out(5, double-buffered)
    per_row = 4 * (2 * d + 128 + 64 + 2 * 5) + 64
    budget = 24 * 1024 * 1024            # conservative: fits v5e/v6e/v7x scoped VMEM
    vmem_cap = max(128, (budget // per_row) // 128 * 128)
    bb = _round_up(pl.cdiv(batch, 2), 128)   # >= 2 steps, lane/sublane aligned
    bb = min(bb, 4096, vmem_cap)
    return max(bb, 128)


@functools.partial(jax.jit, static_argnames=("block_b",))
def my_mlp_pallas(x, w1, b1, w2, b2, w3, b3, *, block_b=None):
    B, D = x.shape
    H1 = w1.shape[1]   # 128
    H2 = w2.shape[1]   # 64
    OUT = w3.shape[1]  # 5

    bb = _pick_block_b(B, D, block_b)

    # Biases as (1, H) rows for clean lane-wise broadcast inside the kernel.
    b1r = b1.reshape(1, H1).astype(jnp.float32)
    b2r = b2.reshape(1, H2).astype(jnp.float32)
    b3r = b3.reshape(1, OUT).astype(jnp.float32)

    grid = (pl.cdiv(B, bb),)
    vmem = pltpu.MemorySpace.VMEM

    out = pl.pallas_call(
        _mlp_kernel,
        out_shape=jax.ShapeDtypeStruct((B, OUT), jnp.float32),
        grid_spec=pl.GridSpec(
            grid=grid,
            in_specs=[
                pl.BlockSpec((bb, D), lambda i: (i, 0)),                       # x tile
                pl.BlockSpec((D, H1), lambda i: (0, 0), memory_space=vmem),    # W1 (resident)
                pl.BlockSpec((1, H1), lambda i: (0, 0), memory_space=vmem),    # b1
                pl.BlockSpec((H1, H2), lambda i: (0, 0), memory_space=vmem),   # W2
                pl.BlockSpec((1, H2), lambda i: (0, 0), memory_space=vmem),    # b2
                pl.BlockSpec((H2, OUT), lambda i: (0, 0), memory_space=vmem),  # W3
                pl.BlockSpec((1, OUT), lambda i: (0, 0), memory_space=vmem),   # b3
            ],
            out_specs=pl.BlockSpec((bb, OUT), lambda i: (i, 0)),
        ),
        compiler_params=pltpu.CompilerParams(
            dimension_semantics=("parallel",),
            vmem_limit_bytes=64 * 1024 * 1024),
    )(x, w1, b1r, w2, b2r, w3, b3r)

    return out


def _init_linear(key, fan_in, fan_out):
    # Mimic PyTorch nn.Linear default init: U(-1/sqrt(fan_in), 1/sqrt(fan_in)).
    kw, kb = jax.random.split(key)
    bound = 1.0 / jnp.sqrt(jnp.float32(fan_in))
    # Stored as [in, out] (transpose of PyTorch's [out, in]) for x @ W.
    w = jax.random.uniform(kw, (fan_in, fan_out), jnp.float32, -bound, bound)
    b = jax.random.uniform(kb, (fan_out,), jnp.float32, -bound, bound)
    return w, b


def _reference(x, w1, b1, w2, b2, w3, b3):
    o = jnp.maximum(x @ w1 + b1, 0.0)
    o = jnp.maximum(o @ w2 + b2, 0.0)
    return o @ w3 + b3


if __name__ == "__main__":
    input_dim = 32
    batch = 8   # NOTE: at B=8 this is overhead-bound; the kernel pays off for big batches.

    key = jax.random.PRNGKey(0)
    kx, k1, k2, k3 = jax.random.split(key, 4)

    x = jax.random.normal(kx, (batch, input_dim), jnp.float32)
    w1, b1 = _init_linear(k1, input_dim, 128)
    w2, b2 = _init_linear(k2, 128, 64)
    w3, b3 = _init_linear(k3, 64, 5)

    out = my_mlp_pallas(x, w1, b1, w2, b2, w3, b3)
    out = jax.block_until_ready(out)

    ref = _reference(x, w1, b1, w2, b2, w3, b3)
    assert out.shape == (batch, 5)
    # f32 everywhere; only the TPU MXU's default (multi-pass bf16) f32 matmul
    # precision differs from the exact reference.
    assert jnp.allclose(out, ref, atol=1e-2, rtol=1e-2)

    print("KERNEL_OK")
</pallas_src>

<mosaic_0001>
module attributes {stable_mosaic.version = 11 : i64} {
  func.func @_mlp_kernel(%arg0: i32, %arg1: memref<8x32xf32, #tpu.memory_space<vmem>>, %arg2: memref<32x128xf32, #tpu.memory_space<vmem>>, %arg3: memref<1x128xf32, #tpu.memory_space<vmem>>, %arg4: memref<128x64xf32, #tpu.memory_space<vmem>>, %arg5: memref<1x64xf32, #tpu.memory_space<vmem>>, %arg6: memref<64x5xf32, #tpu.memory_space<vmem>>, %arg7: memref<1x5xf32, #tpu.memory_space<vmem>>, %arg8: memref<8x5xf32, #tpu.memory_space<vmem>>) attributes {dimension_semantics = [#tpu.dimension_semantics<parallel>], iteration_bounds = array<i64: 1>, scalar_prefetch = 0 : i64, scratch_operands = 0 : i64, tpu.core_type = #tpu.core_type<tc>, window_params = [{transform_indices = @transform_0, window_bounds = array<i64: 8, 32>}, {pipeline_mode = #tpu.pipeline_mode<synchronous>, transform_indices = @transform_1, window_bounds = array<i64: 32, 128>}, {pipeline_mode = #tpu.pipeline_mode<synchronous>, transform_indices = @transform_2, window_bounds = array<i64: 1, 128>}, {pipeline_mode = #tpu.pipeline_mode<synchronous>, transform_indices = @transform_3, window_bounds = array<i64: 128, 64>}, {pipeline_mode = #tpu.pipeline_mode<synchronous>, transform_indices = @transform_4, window_bounds = array<i64: 1, 64>}, {pipeline_mode = #tpu.pipeline_mode<synchronous>, transform_indices = @transform_5, window_bounds = array<i64: 64, 5>}, {pipeline_mode = #tpu.pipeline_mode<synchronous>, transform_indices = @transform_6, window_bounds = array<i64: 1, 5>}, {transform_indices = @transform_7, window_bounds = array<i64: 8, 5>}]} {
    %c0 = arith.constant 0 : index
    %c0_0 = arith.constant 0 : index
    %0 = vector.load %arg1[%c0, %c0_0] : memref<8x32xf32, #tpu.memory_space<vmem>>, vector<8x32xf32>
    %c0_1 = arith.constant 0 : index
    %c0_2 = arith.constant 0 : index
    %1 = vector.load %arg2[%c0_1, %c0_2] : memref<32x128xf32, #tpu.memory_space<vmem>>, vector<32x128xf32>
    %cst = arith.constant dense<0.000000e+00> : vector<8x128xf32>
    %2 = tpu.matmul %0, %1, %cst {dimension_numbers = #tpu.dot_dimension_numbers<[1], [0], [0], [1], [0, 0, 1, 1], [], []>} : vector<8x32xf32>, vector<32x128xf32>, vector<8x128xf32> -> vector<8x128xf32>
    %c0_3 = arith.constant 0 : index
    %c0_4 = arith.constant 0 : index
    %3 = vector.load %arg3[%c0_3, %c0_4] : memref<1x128xf32, #tpu.memory_space<vmem>>, vector<1x128xf32>
    %4 = vector.broadcast %3 : vector<1x128xf32> to vector<8x128xf32>
    %5 = arith.addf %2, %4 : vector<8x128xf32>
    %cst_5 = arith.constant 0.000000e+00 : f32
    %6 = vector.broadcast %cst_5 : f32 to vector<8x128xf32>
    %7 = arith.maximumf %5, %6 : vector<8x128xf32>
    %c0_6 = arith.constant 0 : index
    %c0_7 = arith.constant 0 : index
    %8 = vector.load %arg4[%c0_6, %c0_7] : memref<128x64xf32, #tpu.memory_space<vmem>>, vector<128x64xf32>
    %cst_8 = arith.constant dense<0.000000e+00> : vector<8x64xf32>
    %9 = tpu.matmul %7, %8, %cst_8 {dimension_numbers = #tpu.dot_dimension_numbers<[1], [0], [0], [1], [0, 0, 1, 1], [], []>} : vector<8x128xf32>, vector<128x64xf32>, vector<8x64xf32> -> vector<8x64xf32>
    %c0_9 = arith.constant 0 : index
    %c0_10 = arith.constant 0 : index
    %10 = vector.load %arg5[%c0_9, %c0_10] : memref<1x64xf32, #tpu.memory_space<vmem>>, vector<1x64xf32>
    %11 = vector.broadcast %10 : vector<1x64xf32> to vector<8x64xf32>
    %12 = arith.addf %9, %11 : vector<8x64xf32>
    %cst_11 = arith.constant 0.000000e+00 : f32
    %13 = vector.broadcast %cst_11 : f32 to vector<8x64xf32>
    %14 = arith.maximumf %12, %13 : vector<8x64xf32>
    %c0_12 = arith.constant 0 : index
    %c0_13 = arith.constant 0 : index
    %15 = vector.load %arg6[%c0_12, %c0_13] : memref<64x5xf32, #tpu.memory_space<vmem>>, vector<64x5xf32>
    %cst_14 = arith.constant dense<0.000000e+00> : vector<8x5xf32>
    %16 = tpu.matmul %14, %15, %cst_14 {dimension_numbers = #tpu.dot_dimension_numbers<[1], [0], [0], [1], [0, 0, 1, 1], [], []>} : vector<8x64xf32>, vector<64x5xf32>, vector<8x5xf32> -> vector<8x5xf32>
    %c0_15 = arith.constant 0 : index
    %c0_16 = arith.constant 0 : index
    %17 = vector.load %arg7[%c0_15, %c0_16] : memref<1x5xf32, #tpu.memory_space<vmem>>, vector<1x5xf32>
    %18 = vector.broadcast %17 : vector<1x5xf32> to vector<8x5xf32>
    %19 = arith.addf %16, %18 : vector<8x5xf32>
    %c0_17 = arith.constant 0 : index
    %c0_18 = arith.constant 0 : index
    %20 = vector.load %arg8[%c0_17, %c0_18] : memref<8x5xf32, #tpu.memory_space<vmem>>, vector<8x5xf32>
    tpu.vector_store %arg8[%c0_17, %c0_18], %19 {strides = array<i32>} : memref<8x5xf32, #tpu.memory_space<vmem>>, vector<8x5xf32>,
    return
  }
  func.func @transform_0(%arg0: i32) -> (i32, i32) {
    %c0_i32 = arith.constant 0 : i32
    %c0_i32_0 = arith.constant 0 : i32
    return %arg0, %c0_i32 : i32, i32
  }
  func.func @transform_1(%arg0: i32) -> (i32, i32) {
    %c0_i32 = arith.constant 0 : i32
    %c0_i32_0 = arith.constant 0 : i32
    %c0_i32_1 = arith.constant 0 : i32
    return %c0_i32, %c0_i32_0 : i32, i32
  }
  func.func @transform_2(%arg0: i32) -> (i32, i32) {
    %c0_i32 = arith.constant 0 : i32
    %c0_i32_0 = arith.constant 0 : i32
    %c0_i32_1 = arith.constant 0 : i32
    return %c0_i32, %c0_i32_0 : i32, i32
  }
  func.func @transform_3(%arg0: i32) -> (i32, i32) {
    %c0_i32 = arith.constant 0 : i32
    %c0_i32_0 = arith.constant 0 : i32
    %c0_i32_1 = arith.constant 0 : i32
    return %c0_i32, %c0_i32_0 : i32, i32
  }
  func.func @transform_4(%arg0: i32) -> (i32, i32) {
    %c0_i32 = arith.constant 0 : i32
    %c0_i32_0 = arith.constant 0 : i32
    %c0_i32_1 = arith.constant 0 : i32
    return %c0_i32, %c0_i32_0 : i32, i32
  }
  func.func @transform_5(%arg0: i32) -> (i32, i32) {
    %c0_i32 = arith.constant 0 : i32
    %c0_i32_0 = arith.constant 0 : i32
    %c0_i32_1 = arith.constant 0 : i32
    return %c0_i32, %c0_i32_0 : i32, i32
  }
  func.func @transform_6(%arg0: i32) -> (i32, i32) {
    %c0_i32 = arith.constant 0 : i32
    %c0_i32_0 = arith.constant 0 : i32
    %c0_i32_1 = arith.constant 0 : i32
    return %c0_i32, %c0_i32_0 : i32, i32
  }
  func.func @transform_7(%arg0: i32) -> (i32, i32) {
    %c0_i32 = arith.constant 0 : i32
    %c0_i32_0 = arith.constant 0 : i32
    return %arg0, %c0_i32 : i32, i32
  }
}

</mosaic_0001>

<llo_original>
// kernel: my_mlp_pallas.1
$region0: #{my_mlp_pallas.1}
  #allocation0 [shape = 'u32[]', space=smem, size = 0x4, offset = 0x4, fixed_abs, tag = 'smem constant byte address 0x4 - core index']
  #allocation1 [shape = 'u32[144,128]{1,0:T(1,128)}', space=vmem, size = 0x12000, scoped, tag = 'internal scratch']
  %s0 = inlined_call_operand.hbm [shape: f32[8,32], index: 0, kind: input, shape index: {}]
  %s1 = inlined_call_operand.hbm [shape: f32[32,128], index: 1, kind: input, shape index: {}]
  %s2 = inlined_call_operand.hbm [shape: f32[1,128], index: 2, kind: input, shape index: {}]
  %s3 = inlined_call_operand.hbm [shape: f32[128,64], index: 3, kind: input, shape index: {}]
  %s4 = inlined_call_operand.hbm [shape: f32[1,64], index: 4, kind: input, shape index: {}]
  %s5 = inlined_call_operand.hbm [shape: f32[64,5], index: 5, kind: input, shape index: {}]
  %s6 = inlined_call_operand.hbm [shape: f32[1,5], index: 6, kind: input, shape index: {}]
  %s7 = inlined_call_operand.hbm [shape: f32[8,5], index: 7, kind: output, shape index: {}]
  %s8 = sld [smem:[#allocation0]]
  $region66: #{my_mlp_pallas.1} parent=0
    _
  %s10 = ssub.s32 1, %s8
  %s11 = scalar_select 0, %s10, %s8
  $region1: #{my_mlp_pallas.1} parent=0
    #allocation2 [shape = 'u8[4096]{0}', space=vmem, size = 0x1000, scoped, tag = 'input window, operand 0, single buffered']
    #allocation3 [shape = 's32[1]{0}', space=sflag, size = 0x4, scoped, tag = 'scoped memory for my_mlp_pallas.1']
    #allocation4 [shape = 's32[1]{0}', space=sflag, size = 0x4, scoped, tag = 'scoped memory for my_mlp_pallas.1']
    #allocation5 [shape = 'u8[16384]{0}', space=vmem, size = 0x4000, scoped, tag = 'input window, operand 1, single buffered']
    #allocation6 [shape = 's32[1]{0}', space=sflag, size = 0x4, scoped, tag = 'scoped memory for my_mlp_pallas.1']
    #allocation7 [shape = 'u8[512]{0}', space=vmem, size = 0x400, scoped, tag = 'input window, operand 2, single buffered']
    #allocation8 [shape = 'u8[65536]{0}', space=vmem, size = 0x10000, scoped, tag = 'input window, operand 3, single buffered']
    #allocation9 [shape = 's32[1]{0}', space=sflag, size = 0x4, scoped, tag = 'scoped memory for my_mlp_pallas.1']
    #allocation10 [shape = 'u8[512]{0}', space=vmem, size = 0x400, scoped, tag = 'input window, operand 4, single buffered']
    #allocation11 [shape = 'u8[32768]{0}', space=vmem, size = 0x8000, scoped, tag = 'input window, operand 5, single buffered']
    #allocation12 [shape = 's32[1]{0}', space=sflag, size = 0x4, scoped, tag = 'scoped memory for my_mlp_pallas.1']
    #allocation13 [shape = 'u8[512]{0}', space=vmem, size = 0x400, scoped, tag = 'input window, operand 6, single buffered']
    #allocation14 [shape = 'u8[4096]{0}', space=vmem, size = 0x1000, scoped, tag = 'output window, operand 0, single buffered']
    %12 = vsyncpa [#allocation3], 0
    %13 = vsyncpa [#allocation6], 0
    %14 = vsyncpa [#allocation9], 0
    %15 = vsyncpa [#allocation12], 0
    %16 = vsyncpa [#allocation4], 0
    // Predicated region
    $region2: #{my_mlp_pallas.1} parent=1 // pred_check
      _
    $region3: #{my_mlp_pallas.1} parent=1 // pred_check_branch
      %18 = sbr.rel (0) target = $region5
    $region4: #{my_mlp_pallas.1} parent=1 // pred_region
      %s20 = ssub.s32 128, 128
      %21 = vsyncadd [#allocation3], %s20
      %s23 = sshll.u32 [#allocation2], 4
      %s24 = int_to_ptr.vmem [resolvable:$true] %s23
      %26 = dma.hbm_to_vmem [thread:$0]  %s0, 128, %s24, [#allocation3]
    $region5: #{my_mlp_pallas.1} parent=1 // pred_fallthru
      _
    // Predicated region
    $region6: #{my_mlp_pallas.1} parent=1 // pred_check
      _
    $region7: #{my_mlp_pallas.1} parent=1 // pred_check_branch
      %28 = sbr.rel (0) target = $region9
    $region8: #{my_mlp_pallas.1} parent=1 // pred_region
      %s30 = ssub.s32 512, 512
      %31 = vsyncadd [#allocation6], %s30
      %s32 = sshll.u32 [#allocation5], 4
      %s33 = int_to_ptr.vmem [resolvable:$true] %s32
      %38 = dma.hbm_to_vmem [thread:$0]  %s1, 512, %s33, [#allocation6], 128, 128, 8
    $region9: #{my_mlp_pallas.1} parent=1 // pred_fallthru
      _
    // Predicated region
    $region10: #{my_mlp_pallas.1} parent=1 // pred_check
      _
    $region11: #{my_mlp_pallas.1} parent=1 // pred_check_branch
      %40 = sbr.rel (0) target = $region13
    $region12: #{my_mlp_pallas.1} parent=1 // pred_region
      %s42 = ssub.s32 16, 16
      %43 = vsyncadd [#allocation6], %s42
      %s45 = sshll.u32 [#allocation7], 4
      %s46 = int_to_ptr.vmem [resolvable:$true] %s45
      %48 = dma.hbm_to_vmem [thread:$0]  %s2, 16, %s46, [#allocation6]
    $region13: #{my_mlp_pallas.1} parent=1 // pred_fallthru
      _
    // Predicated region
    $region14: #{my_mlp_pallas.1} parent=1 // pred_check
      _
    $region15: #{my_mlp_pallas.1} parent=1 // pred_check_branch
      %50 = sbr.rel (0) target = $region17
    $region16: #{my_mlp_pallas.1} parent=1 // pred_region
      %s52 = ssub.s32 2048, 2048
      %53 = vsyncadd [#allocation9], %s52
      %s54 = sshll.u32 [#allocation8], 4
      %s55 = int_to_ptr.vmem [resolvable:$true] %s54
      %60 = dma.hbm_to_vmem [thread:$0]  %s3, 2048, %s55, [#allocation9], 128, 128, 8
    $region17: #{my_mlp_pallas.1} parent=1 // pred_fallthru
      _
    // Predicated region
    $region18: #{my_mlp_pallas.1} parent=1 // pred_check
      _
    $region19: #{my_mlp_pallas.1} parent=1 // pred_check_branch
      %62 = sbr.rel (0) target = $region21
    $region20: #{my_mlp_pallas.1} parent=1 // pred_region
      %s64 = ssub.s32 16, 16
      %65 = vsyncadd [#allocation9], %s64
      %s67 = sshll.u32 [#allocation10], 4
      %s68 = int_to_ptr.vmem [resolvable:$true] %s67
      %70 = dma.hbm_to_vmem [thread:$0]  %s4, 16, %s68, [#allocation9]
    $region21: #{my_mlp_pallas.1} parent=1 // pred_fallthru
      _
    // Predicated region
    $region22: #{my_mlp_pallas.1} parent=1 // pred_check
      _
    $region23: #{my_mlp_pallas.1} parent=1 // pred_check_branch
      %72 = sbr.rel (0) target = $region25
    $region24: #{my_mlp_pallas.1} parent=1 // pred_region
      %s74 = ssub.s32 1024, 1024
      %75 = vsyncadd [#allocation12], %s74
      %s76 = sshll.u32 [#allocation11], 4
      %s77 = int_to_ptr.vmem [resolvable:$true] %s76
      %82 = dma.hbm_to_vmem [thread:$0]  %s5, 1024, %s77, [#allocation12], 128, 128, 8
    $region25: #{my_mlp_pallas.1} parent=1 // pred_fallthru
      _
    // Predicated region
    $region26: #{my_mlp_pallas.1} parent=1 // pred_check
      _
    $region27: #{my_mlp_pallas.1} parent=1 // pred_check_branch
      %84 = sbr.rel (0) target = $region29
    $region28: #{my_mlp_pallas.1} parent=1 // pred_region
      %s86 = ssub.s32 16, 16
      %87 = vsyncadd [#allocation12], %s86
      %s89 = sshll.u32 [#allocation13], 4
      %s90 = int_to_ptr.vmem [resolvable:$true] %s89
      %92 = dma.hbm_to_vmem [thread:$0]  %s6, 16, %s90, [#allocation12]
    $region29: #{my_mlp_pallas.1} parent=1 // pred_fallthru
      _
    // Predicated region
    $region30: #{my_mlp_pallas.1} parent=1 // pred_check
      _
    $region31: #{my_mlp_pallas.1} parent=1 // pred_check_branch
      %94 = sbr.rel (0) target = $region33
    $region32: #{my_mlp_pallas.1} parent=1 // pred_region
      %95 = dma.done [#allocation3], 128
    $region33: #{my_mlp_pallas.1} parent=1 // pred_fallthru
      _
    // Predicated region
    $region34: #{my_mlp_pallas.1} parent=1 // pred_check
      _
    $region35: #{my_mlp_pallas.1} parent=1 // pred_check_branch
      %97 = sbr.rel (0) target = $region37
    $region36: #{my_mlp_pallas.1} parent=1 // pred_region
      %98 = dma.done [#allocation6], 512
    $region37: #{my_mlp_pallas.1} parent=1 // pred_fallthru
      _
    // Predicated region
    $region38: #{my_mlp_pallas.1} parent=1 // pred_check
      _
    $region39: #{my_mlp_pallas.1} parent=1 // pred_check_branch
      %100 = sbr.rel (0) target = $region41
    $region40: #{my_mlp_pallas.1} parent=1 // pred_region
      %101 = dma.done [#allocation6], 16
    $region41: #{my_mlp_pallas.1} parent=1 // pred_fallthru
      _
    // Predicated region
    $region42: #{my_mlp_pallas.1} parent=1 // pred_check
      _
    $region43: #{my_mlp_pallas.1} parent=1 // pred_check_branch
      %103 = sbr.rel (0) target = $region45
    $region44: #{my_mlp_pallas.1} parent=1 // pred_region
      %104 = dma.done [#allocation9], 2048
    $region45: #{my_mlp_pallas.1} parent=1 // pred_fallthru
      _
    // Predicated region
    $region46: #{my_mlp_pallas.1} parent=1 // pred_check
      _
    $region47: #{my_mlp_pallas.1} parent=1 // pred_check_branch
      %106 = sbr.rel (0) target = $region49
    $region48: #{my_mlp_pallas.1} parent=1 // pred_region
      %107 = dma.done [#allocation9], 16
    $region49: #{my_mlp_pallas.1} parent=1 // pred_fallthru
      _
    // Predicated region
    $region50: #{my_mlp_pallas.1} parent=1 // pred_check
      _
    $region51: #{my_mlp_pallas.1} parent=1 // pred_check_branch
      %109 = sbr.rel (0) target = $region53
    $region52: #{my_mlp_pallas.1} parent=1 // pred_region
      %110 = dma.done [#allocation12], 1024
    $region53: #{my_mlp_pallas.1} parent=1 // pred_fallthru
      _
    // Predicated region
    $region54: #{my_mlp_pallas.1} parent=1 // pred_check
      _
    $region55: #{my_mlp_pallas.1} parent=1 // pred_check_branch
      %112 = sbr.rel (0) target = $region57
    $region56: #{my_mlp_pallas.1} parent=1 // pred_region
      %113 = dma.done [#allocation12], 16
    $region57: #{my_mlp_pallas.1} parent=1 // pred_fallthru
      _
    %v114 = vld [vmem:[#allocation2] sm:$0xff]
    %v115 = vld [vmem:[#allocation5] sm:$0xff]
    %v116 = vld [vmem:[#allocation5 + $0x8] sm:$0xff]
    %v117 = vld [vmem:[#allocation5 + $0x10] sm:$0xff]
    %v118 = vld [vmem:[#allocation5 + $0x18] sm:$0xff]
    %v119 = vld [vmem:[#allocation7] sm:$0x1]
    %v121 = vlaneseq
    %v122 = vshrl.u32 %v121, 7
    %v123 = vsub.s32 0, %v122
    %v124 = vrot.slane %v119, %v123
    %vm126 = vcmask 261120
    %v128 = vsel %vm126, %v114, 0
    %130 = vmatprep.subr.mxu0 0.0
    %131 = vmatpush1.msra.mxu0 %v115
    %132 = vmatprep.subr.mxu0 0.0
    %133 = vmatpush1.msra.mxu0 %v116
    %134 = vmatprep.subr.mxu0 0.0
    %135 = vmatpush1.msra.mxu0 %v117
    %136 = vmatprep.subr.mxu0 0.0
    %137 = vmatpush1.msra.mxu0 %v118
    %138 = vmatprep.subr.mxu0 0.0
    %139 = vmatpush1.msra.mxu0 0.0
    %140 = vmatprep.subr.mxu0 0.0
    %141 = vmatpush1.msra.mxu0 0.0
    %142 = vmatprep.subr.mxu0 0.0
    %143 = vmatpush1.msra.mxu0 0.0
    %144 = vmatprep.subr.mxu0 0.0
    %145 = vmatpush1.msra.mxu0 0.0
    %146 = vmatprep.subr.mxu0 0.0
    %147 = vmatpush1.msra.mxu0 0.0
    %148 = vmatprep.subr.mxu0 0.0
    %149 = vmatpush1.msra.mxu0 0.0
    %150 = vmatprep.subr.mxu0 0.0
    %151 = vmatpush1.msra.mxu0 0.0
    %152 = vmatprep.subr.mxu0 0.0
    %153 = vmatpush1.msra.mxu0 0.0
    %154 = vmatprep.subr.mxu0 0.0
    %155 = vmatpush1.msra.mxu0 0.0
    %156 = vmatprep.subr.mxu0 0.0
    %157 = vmatpush1.msra.mxu0 0.0
    %158 = vmatprep.subr.mxu0 0.0
    %159 = vmatpush1.msra.mxu0 0.0
    %160 = vmatprep.subr.mxu0 0.0
    %161 = vmatpush1.msra.mxu0 0.0
    %162 = vmatprep.subr.mxu0 0.0
    %163 = vmatpush1.msra.mxu0 0.0
    %164 = vmatprep.subr.mxu0 0.0
    %165 = vmatpush1.msra.mxu0 0.0
    %166 = vmatprep.subr.mxu0 0.0
    %167 = vmatpush1.msra.mxu0 0.0
    %168 = vmatprep.subr.mxu0 0.0
    %169 = vmatpush1.msra.mxu0 0.0
    %170 = vmatprep.subr.mxu0 0.0
    %171 = vmatpush1.msra.mxu0 0.0
    %172 = vmatprep.subr.mxu0 0.0
    %173 = vmatpush1.msra.mxu0 0.0
    %174 = vmatprep.subr.mxu0 0.0
    %175 = vmatpush1.msra.mxu0 0.0
    %176 = vmatprep.subr.mxu0 0.0
    %177 = vmatpush1.msra.mxu0 0.0
    %178 = vmatprep.subr.mxu0 0.0
    %179 = vmatpush1.msra.mxu0 0.0
    %180 = vmatprep.subr.mxu0 0.0
    %181 = vmatpush1.msra.mxu0 0.0
    %182 = vmatprep.subr.mxu0 0.0
    %183 = vmatpush1.msra.mxu0 0.0
    %184 = vmatprep.subr.mxu0 0.0
    %185 = vmatpush1.msra.mxu0 0.0
    %186 = vmatprep.subr.mxu0 0.0
    %187 = vmatpush1.msra.mxu0 0.0
    %188 = vmatprep.subr.mxu0 0.0
    %189 = vmatpush1.msra.mxu0 0.0
    %190 = vmatprep.subr.mxu0 0.0
    %191 = vmatpush1.msra.mxu0 0.0
    %192 = vmatprep.subr.mxu0 0.0
    %193 = vmatpush1.msra.mxu0 0.0
    %194 = vmatprep.mubr.f32.mxu0 0.0
    %195 = vmatmul.mubr.f32.gmra.mrb[0].mxu0 %v128
    %v196 = vpop.f32.mrb[0].mxu0
    %v197 = vadd.f32 %v124, %v196
    %v198 = vpop.f32.mrb[0].mxu0
    %199 = vdwg.mxu0
    %v200 = vmax.f32 %v197, 0.0
    %v201 = vld [vmem:[#allocation8] sm:$0xff]
    %v202 = vld [vmem:[#allocation8 + $0x8] sm:$0xff]
    %v203 = vld [vmem:[#allocation8 + $0x10] sm:$0xff]
    %v204 = vld [vmem:[#allocation8 + $0x18] sm:$0xff]
    %v205 = vld [vmem:[#allocation8 + $0x20] sm:$0xff]
    %v206 = vld [vmem:[#allocation8 + $0x28] sm:$0xff]
    %v207 = vld [vmem:[#allocation8 + $0x30] sm:$0xff]
    %v208 = vld [vmem:[#allocation8 + $0x38] sm:$0xff]
    %v209 = vld [vmem:[#allocation8 + $0x40] sm:$0xff]
    %v210 = vld [vmem:[#allocation8 + $0x48] sm:$0xff]
    %v211 = vld [vmem:[#allocation8 + $0x50] sm:$0xff]
    %v212 = vld [vmem:[#allocation8 + $0x58] sm:$0xff]
    %v213 = vld [vmem:[#allocation8 + $0x60] sm:$0xff]
    %v214 = vld [vmem:[#allocation8 + $0x68] sm:$0xff]
    %v215 = vld [vmem:[#allocation8 + $0x70] sm:$0xff]
    %v216 = vld [vmem:[#allocation8 + $0x78] sm:$0xff]
    %v217 = vld [vmem:[#allocation10] sm:$0x1]
    %v219 = vlaneseq
    %v220 = vshrl.u32 %v219, 7
    %v221 = vsub.s32 0, %v220
    %v222 = vrot.slane %v217, %v221
    %224 = vmatprep.subr.mxu0 0.0
    %225 = vmatpush1.msra.mxu0 %v201
    %226 = vmatprep.subr.mxu0 0.0
    %227 = vmatpush1.msra.mxu0 %v202
    %228 = vmatprep.subr.mxu0 0.0
    %229 = vmatpush1.msra.mxu0 %v203
    %230 = vmatprep.subr.mxu0 0.0
    %231 = vmatpush1.msra.mxu0 %v204
    %232 = vmatprep.subr.mxu0 0.0
    %233 = vmatpush1.msra.mxu0 %v205
    %234 = vmatprep.subr.mxu0 0.0
    %235 = vmatpush1.msra.mxu0 %v206
    %236 = vmatprep.subr.mxu0 0.0
    %237 = vmatpush1.msra.mxu0 %v207
    %238 = vmatprep.subr.mxu0 0.0
    %239 = vmatpush1.msra.mxu0 %v208
    %240 = vmatprep.subr.mxu0 0.0
    %241 = vmatpush1.msra.mxu0 %v209
    %242 = vmatprep.subr.mxu0 0.0
    %243 = vmatpush1.msra.mxu0 %v210
    %244 = vmatprep.subr.mxu0 0.0
    %245 = vmatpush1.msra.mxu0 %v211
    %246 = vmatprep.subr.mxu0 0.0
    %247 = vmatpush1.msra.mxu0 %v212
    %248 = vmatprep.subr.mxu0 0.0
    %249 = vmatpush1.msra.mxu0 %v213
    %250 = vmatprep.subr.mxu0 0.0
    %251 = vmatpush1.msra.mxu0 %v214
    %252 = vmatprep.subr.mxu0 0.0
    %253 = vmatpush1.msra.mxu0 %v215
    %254 = vmatprep.subr.mxu0 0.0
    %255 = vmatpush1.msra.mxu0 %v216
    %256 = vmatprep.subr.mxu0 0.0
    %257 = vmatpush1.msra.mxu0 0.0
    %258 = vmatprep.subr.mxu0 0.0
    %259 = vmatpush1.msra.mxu0 0.0
    %260 = vmatprep.subr.mxu0 0.0
    %261 = vmatpush1.msra.mxu0 0.0
    %262 = vmatprep.subr.mxu0 0.0
    %263 = vmatpush1.msra.mxu0 0.0
    %264 = vmatprep.subr.mxu0 0.0
    %265 = vmatpush1.msra.mxu0 0.0
    %266 = vmatprep.subr.mxu0 0.0
    %267 = vmatpush1.msra.mxu0 0.0
    %268 = vmatprep.subr.mxu0 0.0
    %269 = vmatpush1.msra.mxu0 0.0
    %270 = vmatprep.subr.mxu0 0.0
    %271 = vmatpush1.msra.mxu0 0.0
    %272 = vmatprep.subr.mxu0 0.0
    %273 = vmatpush1.msra.mxu0 0.0
    %274 = vmatprep.subr.mxu0 0.0
    %275 = vmatpush1.msra.mxu0 0.0
    %276 = vmatprep.subr.mxu0 0.0
    %277 = vmatpush1.msra.mxu0 0.0
    %278 = vmatprep.subr.mxu0 0.0
    %279 = vmatpush1.msra.mxu0 0.0
    %280 = vmatprep.subr.mxu0 0.0
    %281 = vmatpush1.msra.mxu0 0.0
    %282 = vmatprep.subr.mxu0 0.0
    %283 = vmatpush1.msra.mxu0 0.0
    %284 = vmatprep.subr.mxu0 0.0
    %285 = vmatpush1.msra.mxu0 0.0
    %286 = vmatprep.subr.mxu0 0.0
    %287 = vmatpush1.msra.mxu0 0.0
    %288 = vmatprep.mubr.f32.mxu0 0.0
    %289 = vmatmul.mubr.f32.gmra.mrb[0].mxu0 %v200
    %v290 = vpop.f32.mrb[0].mxu0
    %v291 = vadd.f32 %v222, %v290
    %v292 = vpop.f32.mrb[0].mxu0
    %293 = vdwg.mxu0
    %v294 = vmax.f32 %v291, 0.0
    %v295 = vld [vmem:[#allocation11] sm:$0xff]
    %v296 = vld [vmem:[#allocation11 + $0x8] sm:$0xff]
    %v297 = vld [vmem:[#allocation11 + $0x10] sm:$0xff]
    %v298 = vld [vmem:[#allocation11 + $0x18] sm:$0xff]
    %v299 = vld [vmem:[#allocation11 + $0x20] sm:$0xff]
    %v300 = vld [vmem:[#allocation11 + $0x28] sm:$0xff]
    %v301 = vld [vmem:[#allocation11 + $0x30] sm:$0xff]
    %v302 = vld [vmem:[#allocation11 + $0x38] sm:$0xff]
    %v303 = vld [vmem:[#allocation13] sm:$0x1]
    %v305 = vlaneseq
    %v306 = vshrl.u32 %v305, 7
    %v307 = vsub.s32 0, %v306
    %v308 = vrot.slane %v303, %v307
    %vm310 = vcmask 523264
    %v312 = vsel %vm310, %v294, 0
    %314 = vmatprep.subr.mxu0 0.0
    %315 = vmatpush1.msra.mxu0 %v295
    %316 = vmatprep.subr.mxu0 0.0
    %317 = vmatpush1.msra.mxu0 %v296
    %318 = vmatprep.subr.mxu0 0.0
    %319 = vmatpush1.msra.mxu0 %v297
    %320 = vmatprep.subr.mxu0 0.0
    %321 = vmatpush1.msra.mxu0 %v298
    %322 = vmatprep.subr.mxu0 0.0
    %323 = vmatpush1.msra.mxu0 %v299
    %324 = vmatprep.subr.mxu0 0.0
    %325 = vmatpush1.msra.mxu0 %v300
    %326 = vmatprep.subr.mxu0 0.0
    %327 = vmatpush1.msra.mxu0 %v301
    %328 = vmatprep.subr.mxu0 0.0
    %329 = vmatpush1.msra.mxu0 %v302
    %330 = vmatprep.subr.mxu0 0.0
    %331 = vmatpush1.msra.mxu0 0.0
    %332 = vmatprep.subr.mxu0 0.0
    %333 = vmatpush1.msra.mxu0 0.0
    %334 = vmatprep.subr.mxu0 0.0
    %335 = vmatpush1.msra.mxu0 0.0
    %336 = vmatprep.subr.mxu0 0.0
    %337 = vmatpush1.msra.mxu0 0.0
    %338 = vmatprep.subr.mxu0 0.0
    %339 = vmatpush1.msra.mxu0 0.0
    %340 = vmatprep.subr.mxu0 0.0
    %341 = vmatpush1.msra.mxu0 0.0
    %342 = vmatprep.subr.mxu0 0.0
    %343 = vmatpush1.msra.mxu0 0.0
    %344 = vmatprep.subr.mxu0 0.0
    %345 = vmatpush1.msra.mxu0 0.0
    %346 = vmatprep.subr.mxu0 0.0
    %347 = vmatpush1.msra.mxu0 0.0
    %348 = vmatprep.subr.mxu0 0.0
    %349 = vmatpush1.msra.mxu0 0.0
    %350 = vmatprep.subr.mxu0 0.0
    %351 = vmatpush1.msra.mxu0 0.0
    %352 = vmatprep.subr.mxu0 0.0
    %353 = vmatpush1.msra.mxu0 0.0
    %354 = vmatprep.subr.mxu0 0.0
    %355 = vmatpush1.msra.mxu0 0.0
    %356 = vmatprep.subr.mxu0 0.0
    %357 = vmatpush1.msra.mxu0 0.0
    %358 = vmatprep.subr.mxu0 0.0
    %359 = vmatpush1.msra.mxu0 0.0
    %360 = vmatprep.subr.mxu0 0.0
    %361 = vmatpush1.msra.mxu0 0.0
    %362 = vmatprep.subr.mxu0 0.0
    %363 = vmatpush1.msra.mxu0 0.0
    %364 = vmatprep.subr.mxu0 0.0
    %365 = vmatpush1.msra.mxu0 0.0
    %366 = vmatprep.subr.mxu0 0.0
    %367 = vmatpush1.msra.mxu0 0.0
    %368 = vmatprep.subr.mxu0 0.0
    %369 = vmatpush1.msra.mxu0 0.0
    %370 = vmatprep.subr.mxu0 0.0
    %371 = vmatpush1.msra.mxu0 0.0
    %372 = vmatprep.subr.mxu0 0.0
    %373 = vmatpush1.msra.mxu0 0.0
    %374 = vmatprep.subr.mxu0 0.0
    %375 = vmatpush1.msra.mxu0 0.0
    %376 = vmatprep.subr.mxu0 0.0
    %377 = vmatpush1.msra.mxu0 0.0
    %378 = vmatprep.mubr.f32.mxu0 0.0
    %379 = vmatmul.mubr.f32.gmra.mrb[0].mxu0 %v312
    %v380 = vpop.f32.mrb[0].mxu0
    %v381 = vadd.f32 %v308, %v380
    %v382 = vpop.f32.mrb[0].mxu0
    %383 = vdwg.mxu0
    %vm384 = vcmask 39936
    %385 = vst.msk [vmem:[#allocation14] sm:$0xff] %vm384, %v381
    // Predicated region
    $region58: #{my_mlp_pallas.1} parent=1 // pred_check
      _
    $region59: #{my_mlp_pallas.1} parent=1 // pred_check_branch
      %387 = sbr.rel (0) target = $region61
    $region60: #{my_mlp_pallas.1} parent=1 // pred_region
      %s389 = ssub.s32 128, 128
      %390 = vsyncadd [#allocation4], %s389
      %s392 = sshll.u32 [#allocation14], 4
      %s393 = int_to_ptr.vmem [resolvable:$true] %s392
      %395 = dma.vmem_to_hbm [thread:$0]  %s393, 128, %s7, [#allocation4]
    $region61: #{my_mlp_pallas.1} parent=1 // pred_fallthru
      _
    // Predicated region
    $region62: #{my_mlp_pallas.1} parent=1 // pred_check
      _
    $region63: #{my_mlp_pallas.1} parent=1 // pred_check_branch
      %397 = sbr.rel (0) target = $region65
    $region64: #{my_mlp_pallas.1} parent=1 // pred_region
      %398 = dma.done [#allocation4], 128
    $region65: #{my_mlp_pallas.1} parent=1 // pred_fallthru
      _
    %399 = vsyncpa [#allocation3], 1
    %400 = vsyncpa [#allocation6], 1
    %401 = vsyncpa [#allocation9], 1
    %402 = vsyncpa [#allocation12], 1
    %403 = vsyncpa [#allocation4], 1

</llo_original>
